<compile_context>
chip_gen: v7x
topology: tpu7x:2x2x1
jax: 0.10.0
libtpu: 0.0.40
codegen_flags: <defaults>
</compile_context>

<pallas_src>
import functools

import numpy as np
import jax
import jax.numpy as jnp
from jax.experimental import pallas as pl
from jax.experimental.pallas import tpu as pltpu


# -------------------------------------------------------------------------
# Module-level constants (PeriodicFeatsTimeEncoder defaults, shrunk for demo)
# -------------------------------------------------------------------------
def construct_frequencies(num_freqs: int, min_period_len: int, max_period_len: int):
    freqs = 2 * np.pi / 2 ** np.linspace(
        np.log2(min_period_len), np.log2(max_period_len), num_freqs
    )
    freqs = freqs[::-1].copy().astype(np.float32)[None, :]  # (1, num_freqs)
    return jnp.asarray(freqs)


def _round_up(x: int, m: int) -> int:
    return (x + m - 1) // m * m


# -------------------------------------------------------------------------
# Fused sincos: one Cody-Waite range reduction shared by both polynomials.
# (Cephes f32 coefficients; all math stays f32 — angles reach O(100) rad.)
# -------------------------------------------------------------------------
_TWO_OVER_PI = 0.6366197723675814
_PIO2_HI = 1.5703125                      # pi/2 split into f32-exact chunks
_PIO2_MD = 4.837512969970703125e-4
_PIO2_LO = 7.54978995489188216e-8
_S1, _S2, _S3 = -1.6666654611e-1, 8.3321608736e-3, -1.9515295891e-4
_C1, _C2, _C3 = 4.166664568298827e-2, -1.388731625493765e-3, 2.443315711809948e-5


def _sincos(x):
    n = jnp.floor(x * _TWO_OVER_PI + 0.5)                        # round to nearest pi/2
    r = ((x - n * _PIO2_HI) - n * _PIO2_MD) - n * _PIO2_LO       # |r| <= ~pi/4
    q = n.astype(jnp.int32) & 3                                  # quadrant
    r2 = r * r
    sin_p = r + r * r2 * (_S1 + r2 * (_S2 + r2 * _S3))
    cos_p = 1.0 - 0.5 * r2 + r2 * r2 * (_C1 + r2 * (_C2 + r2 * _C3))
    swap = (q & 1) == 1
    s = jnp.where(swap, cos_p, sin_p)
    c = jnp.where(swap, sin_p, cos_p)
    s = jnp.where((q & 2) == 2, -s, s)          # sin negative in quadrants 2,3
    c = jnp.where(((q + 1) & 2) == 2, -c, c)    # cos negative in quadrants 1,2
    return s, c


# -------------------------------------------------------------------------
# Pallas kernel
# -------------------------------------------------------------------------
def aligned_time_encoder_kernel(
    left_ref,    # (tn, D)    f32 motion codes (left)
    right_ref,   # (tn, D)    f32 motion codes (right)
    sc_ref,      # (tn, 4)    f32: [t, t_left, t_right, interp_weight]
    w_pp_ref,    # (D, 2*Fq)  f32: [periods | phases*phase_scales]
    w_al_ref,    # (D, 2*Fq)  aligner weights (bf16 by default): [sin | cos]
    freqs_ref,   # (1, Fq)    f32
    out_ref,     # (tn, 2*Fq) out dtype
    *, num_freqs: int,
):
    Fq = num_freqs
    left = left_ref[...]

    w = sc_ref[:, 3:4]                        # (tn, 1) interp weight, lane-broadcast
    one_m_w = 1.0 - w

    # f32 MXU pass: [periods | phases*scales].  Kept in f32 because the result is
    # amplified by freq*t (O(100)) and phase_scales (<=64) before the trig.
    pp = jnp.dot(left, w_pp_ref[...], preferred_element_type=jnp.float32)  # (tn, 2Fq)
    periods = jnp.tanh(pp[:, :Fq]) + 1.0
    phase_term = pp[:, Fq:]

    # Pre-matmul interpolation (exact — the blend is linear in the codes): one aligner
    # matmul on the mixed codes replaces two matmuls + a post-matmul blend.
    mixed = (left * one_m_w + right_ref[...] * w).astype(w_al_ref.dtype)
    al = jnp.dot(mixed, w_al_ref[...], preferred_element_type=jnp.float32)  # (tn, 2Fq)

    freq_per = freqs_ref[...] * periods       # (tn, Fq)
    t = sc_ref[:, 0:1]
    tl = sc_ref[:, 1:2]
    tr = sc_ref[:, 2:3]

    s0, c0 = _sincos(freq_per * t + phase_term)
    sl, cl = _sincos(freq_per * tl + phase_term)
    sr, cr = _sincos(freq_per * tr + phase_term)

    # time_embs = pos - (pos_left*(1-w) + pos_right*w) + aligners(mixed)
    out_ref[:, :Fq] = (s0 - (sl * one_m_w + sr * w) + al[:, :Fq]).astype(out_ref.dtype)
    out_ref[:, Fq:] = (c0 - (cl * one_m_w + cr * w) + al[:, Fq:]).astype(out_ref.dtype)


# -------------------------------------------------------------------------
# Wrapper
# -------------------------------------------------------------------------
def aligned_time_encoder(
    t, left_codes, right_codes, interp_weights, t_left, t_right, params,
    *, row_tile: int = 1024, aligner_dtype=jnp.bfloat16, out_dtype=jnp.float32,
):
    """
    t, t_left, t_right : (B, F) float
    left_codes, right_codes : (B, F, D)
    interp_weights : (B, F, 1)
    params: dict with 'w_periods' (D,Fq), 'w_phases' (D,Fq), 'w_aligners' (D,2Fq),
            'freqs' (1,Fq), 'phase_scales' (1,Fq)   (weights pre-transposed, gain folded)
    returns time_embs of shape (B*F, 2*Fq)   (same as the PyTorch forward)
    """
    B, Fr, D = left_codes.shape
    N = B * Fr
    Fq = params["freqs"].shape[1]
    out_dim = 2 * Fq
    assert Fq % 128 == 0, "num_freqs must be a multiple of 128 (lane-aligned slices/stores)"
    # TODO(synk): for non-multiple num_freqs, pad each column segment (periods/phases/
    # aligner_sin/aligner_cos) to the next 128 lanes and adjust the slices/half-writes.

    # ---- weight preprocessing (once, outside the kernel) ----
    # periods/phases stay f32 (angle precision); phase_scales folded into the phase
    # weight (x@(W*s) == (x@W)*s); aligners in bf16 (linear in the output).
    w_pp = jnp.concatenate(
        [params["w_periods"], params["w_phases"] * params["phase_scales"]], axis=1
    ).astype(jnp.float32)                               # (D, 2*Fq)
    w_al = params["w_aligners"].astype(aligner_dtype)   # (D, 2*Fq)
    freqs = params["freqs"].astype(jnp.float32)         # (1, Fq)

    # ---- row tiling ----
    sub = 16 if np.dtype(out_dtype).itemsize == 2 else 8
    row_tile = max(sub, min(row_tile, _round_up(N, sub)))
    row_tile = _round_up(row_tile, sub)
    # v7x has 2 TensorCores: keep >= 2 grid steps when there is enough work so the
    # "parallel" axis can shard across both cores (v5e/v6e unaffected).
    if _round_up(N, row_tile) // row_tile < 2 and N >= 2 * sub:
        row_tile = _round_up((N + 1) // 2, sub)
    Np = _round_up(N, row_tile)
    grid = (Np // row_tile,)

    left = left_codes.reshape(N, D).astype(jnp.float32)
    right = right_codes.reshape(N, D).astype(jnp.float32)
    scalars = jnp.concatenate(
        [t.reshape(N, 1), t_left.reshape(N, 1), t_right.reshape(N, 1),
         interp_weights.reshape(N, 1)],
        axis=1,
    ).astype(jnp.float32)                               # (N, 4): one DMA per step

    if Np != N:  # pad rows to a tile multiple; padded rows are dropped below
        pad = Np - N
        left = jnp.pad(left, ((0, pad), (0, 0)))
        right = jnp.pad(right, ((0, pad), (0, 0)))
        scalars = jnp.pad(scalars, ((0, pad), (0, 0)))

    al_bytes = np.dtype(aligner_dtype).itemsize
    out_bytes = np.dtype(out_dtype).itemsize
    cost = pl.CostEstimate(
        flops=int(2 * (2 * Np * D * 2 * Fq)),            # two (tn,D)@(D,2Fq) matmuls
        transcendentals=int(4 * Np * Fq),                # 1 tanh + 3 sincos per (row,freq)
        bytes_accessed=int(2 * Np * D * 4 + D * 2 * Fq * 4 + D * 2 * Fq * al_bytes
                           + Np * 4 * 4 + Fq * 4 + Np * out_dim * out_bytes),
    )

    kernel = functools.partial(aligned_time_encoder_kernel, num_freqs=Fq)

    out = pl.pallas_call(
        kernel,
        out_shape=jax.ShapeDtypeStruct((Np, out_dim), out_dtype),
        grid_spec=pltpu.PrefetchScalarGridSpec(
            num_scalar_prefetch=0,
            grid=grid,
            in_specs=[
                pl.BlockSpec((row_tile, D), lambda i: (i, 0)),      # left codes (f32)
                pl.BlockSpec((row_tile, D), lambda i: (i, 0)),      # right codes (f32)
                pl.BlockSpec((row_tile, 4), lambda i: (i, 0)),      # packed scalars
                pl.BlockSpec((D, 2 * Fq), lambda i: (0, 0)),        # periods|phases weights
                pl.BlockSpec((D, 2 * Fq), lambda i: (0, 0)),        # aligner weights
                pl.BlockSpec((1, Fq), lambda i: (0, 0)),            # freqs
            ],
            out_specs=pl.BlockSpec((row_tile, out_dim), lambda i: (i, 0)),
        ),
        compiler_params=pltpu.CompilerParams(
            dimension_semantics=("parallel",),
            # per-step footprint at row_tile=1024, Fq=128 is ~12 MiB (incl. double
            # buffers and live f32 temporaries); 48 MiB leaves headroom under v7x's
            # 64 MiB physical VMEM and allows larger tiles on v5e/v6e.
            vmem_limit_bytes=48 * 1024 * 1024,
        ),
        cost_estimate=cost,
    )(left, right, scalars, w_pp, w_al, freqs)

    return out[:N]


# -------------------------------------------------------------------------
# Pure-JAX f32 reference: a faithful mirror of the PyTorch forward (no weight
# fusing, no pre-mix, highest matmul precision, jnp.sin/cos).
# -------------------------------------------------------------------------
def reference_forward(t, left_codes, right_codes, interp_weights, t_left, t_right, params):
    B, Fr, D = left_codes.shape
    N = B * Fr
    hi = jax.lax.Precision.HIGHEST
    left = left_codes.reshape(N, D)
    right = right_codes.reshape(N, D)

    periods = jnp.tanh(jnp.dot(left, params["w_periods"], precision=hi)) + 1.0
    phases = jnp.dot(left, params["w_phases"], precision=hi)
    al_l = jnp.dot(left, params["w_aligners"], precision=hi)
    al_r = jnp.dot(right, params["w_aligners"], precision=hi)
    freqs = params["freqs"]
    phase_scales = params["phase_scales"]

    def pos(tv):
        raw = freqs * periods * tv.reshape(N, 1) + phases * phase_scales
        return jnp.concatenate([jnp.sin(raw), jnp.cos(raw)], axis=1)

    pe, pel, per_ = pos(t), pos(t_left), pos(t_right)
    w = interp_weights.reshape(N, 1)
    rem = pel * (1.0 - w) + per_ * w
    add = al_l * (1.0 - w) + al_r * w
    return pe - rem + add


# -------------------------------------------------------------------------
# Main
# -------------------------------------------------------------------------
if __name__ == "__main__":
    # Small shapes consistent with the module (shrunk from 512/256 defaults)
    B, Fr = 2, 8              # batch, num_frames  -> N = 16 rows (grid gets 2 steps)
    D = 128                   # latent_dim (motion_z_dim)
    NUM_FREQS = 128           # num_freqs
    MIN_PERIOD, MAX_PERIOD = 16, 1024

    key = jax.random.PRNGKey(0)
    k = jax.random.split(key, 10)

    # --- buffers (deterministic, from module __init__) ---
    freqs = construct_frequencies(NUM_FREQS, MIN_PERIOD, MAX_PERIOD)        # (1, Fq)
    period_lens = 2 * jnp.pi / freqs
    phase_scales = (MAX_PERIOD / period_lens).astype(jnp.float32)           # (1, Fq)

    # --- FullyConnectedLayer weights (randn / sqrt(in_features), bias=False),
    #     stored pre-transposed as (D, out) with the weight_gain folded in ---
    gain = 1.0 / np.sqrt(D)
    w_periods = jax.random.normal(k[0], (D, NUM_FREQS), jnp.float32) * gain
    w_phases = jax.random.normal(k[1], (D, NUM_FREQS), jnp.float32) * gain
    w_aligners = jax.random.normal(k[2], (D, 2 * NUM_FREQS), jnp.float32) * gain

    params = dict(
        w_periods=w_periods, w_phases=w_phases, w_aligners=w_aligners,
        freqs=freqs, phase_scales=phase_scales,
    )

    # --- inputs (moderate t magnitudes keep the f32 angle comparison meaningful) ---
    left_codes = jax.random.normal(k[3], (B, Fr, D), jnp.float32)
    right_codes = jax.random.normal(k[4], (B, Fr, D), jnp.float32)
    interp_weights = jax.random.uniform(k[5], (B, Fr, 1), jnp.float32)
    t_left = jnp.floor(jax.random.uniform(k[6], (B, Fr), jnp.float32) * 128.0)
    dt = jnp.floor(jax.random.uniform(k[7], (B, Fr), jnp.float32) * 32.0) + 1.0
    t_right = t_left + dt
    t = t_left + interp_weights[..., 0] * dt

    ref = reference_forward(t, left_codes, right_codes, interp_weights, t_left, t_right, params)
    ref = np.asarray(jax.block_until_ready(ref))

    # --- f32 aligner path: tight check against the faithful f32 PyTorch mirror ---
    out_f32 = aligned_time_encoder(
        t, left_codes, right_codes, interp_weights, t_left, t_right, params,
        aligner_dtype=jnp.float32,
    )
    out_f32 = np.asarray(jax.block_until_ready(out_f32))
    np.testing.assert_allclose(out_f32, ref, rtol=2e-3, atol=2e-3)

    # --- default split-precision path (f32 angles, bf16 aligners): validated against
    #     the SAME f32 reference; tolerance only covers the (unamplified) bf16 aligner
    #     matmul contribution ---
    out_bf16 = aligned_time_encoder(
        t, left_codes, right_codes, interp_weights, t_left, t_right, params,
    )
    out_bf16 = np.asarray(jax.block_until_ready(out_bf16))
    np.testing.assert_allclose(out_bf16, ref, rtol=0.0, atol=5e-2)

    print("KERNEL_OK")
</pallas_src>

<mosaic_0001>
module attributes {stable_mosaic.version = 11 : i64} {
  func.func @aligned_time_encoder_kernel(%arg0: i32, %arg1: memref<8x128xf32, #tpu.memory_space<vmem>>, %arg2: memref<8x128xf32, #tpu.memory_space<vmem>>, %arg3: memref<8x4xf32, #tpu.memory_space<vmem>>, %arg4: memref<128x256xf32, #tpu.memory_space<vmem>>, %arg5: memref<128x256xf32, #tpu.memory_space<vmem>>, %arg6: memref<1x128xf32, #tpu.memory_space<vmem>>, %arg7: memref<8x256xf32, #tpu.memory_space<vmem>>) attributes {dimension_semantics = [#tpu.dimension_semantics<parallel>], iteration_bounds = array<i64: 2>, scalar_prefetch = 0 : i64, scratch_operands = 0 : i64, tpu.core_type = #tpu.core_type<tc>, window_params = [{transform_indices = @transform_0, window_bounds = array<i64: 8, 128>}, {transform_indices = @transform_1, window_bounds = array<i64: 8, 128>}, {transform_indices = @transform_2, window_bounds = array<i64: 8, 4>}, {pipeline_mode = #tpu.pipeline_mode<synchronous>, transform_indices = @transform_3, window_bounds = array<i64: 128, 256>}, {pipeline_mode = #tpu.pipeline_mode<synchronous>, transform_indices = @transform_4, window_bounds = array<i64: 128, 256>}, {pipeline_mode = #tpu.pipeline_mode<synchronous>, transform_indices = @transform_5, window_bounds = array<i64: 1, 128>}, {transform_indices = @transform_6, window_bounds = array<i64: 8, 256>}]} {
    %c0 = arith.constant 0 : index
    %c0_0 = arith.constant 0 : index
    %0 = vector.load %arg1[%c0, %c0_0] : memref<8x128xf32, #tpu.memory_space<vmem>>, vector<8x128xf32>
    %c0_1 = arith.constant 0 : index
    %c3 = arith.constant 3 : index
    %1 = vector.load %arg3[%c0_1, %c3] : memref<8x4xf32, #tpu.memory_space<vmem>>, vector<8x1xf32>
    %cst = arith.constant 1.000000e+00 : f32
    %2 = vector.broadcast %cst : f32 to vector<8x1xf32>
    %3 = arith.subf %2, %1 : vector<8x1xf32>
    %c0_2 = arith.constant 0 : index
    %c0_3 = arith.constant 0 : index
    %4 = vector.load %arg4[%c0_2, %c0_3] : memref<128x256xf32, #tpu.memory_space<vmem>>, vector<128x256xf32>
    %cst_4 = arith.constant dense<0.000000e+00> : vector<8x256xf32>
    %5 = tpu.matmul %0, %4, %cst_4 {dimension_numbers = #tpu.dot_dimension_numbers<[1], [0], [0], [1], [0, 0, 1, 1], [], []>} : vector<8x128xf32>, vector<128x256xf32>, vector<8x256xf32> -> vector<8x256xf32>
    %6 = vector.extract_strided_slice %5 {offsets = [0, 0], sizes = [8, 128], strides = [1, 1]} : vector<8x256xf32> to vector<8x128xf32>
    %7 = math.tanh %6 : vector<8x128xf32>
    %cst_5 = arith.constant 1.000000e+00 : f32
    %8 = vector.broadcast %cst_5 : f32 to vector<8x128xf32>
    %9 = arith.addf %7, %8 : vector<8x128xf32>
    %10 = vector.extract_strided_slice %5 {offsets = [0, 128], sizes = [8, 128], strides = [1, 1]} : vector<8x256xf32> to vector<8x128xf32>
    %11 = vector.broadcast %3 : vector<8x1xf32> to vector<8x128xf32>
    %12 = arith.mulf %0, %11 : vector<8x128xf32>
    %c0_6 = arith.constant 0 : index
    %c0_7 = arith.constant 0 : index
    %13 = vector.load %arg2[%c0_6, %c0_7] : memref<8x128xf32, #tpu.memory_space<vmem>>, vector<8x128xf32>
    %14 = vector.broadcast %1 : vector<8x1xf32> to vector<8x128xf32>
    %15 = arith.mulf %13, %14 : vector<8x128xf32>
    %16 = arith.addf %12, %15 : vector<8x128xf32>
    %c0_8 = arith.constant 0 : index
    %c0_9 = arith.constant 0 : index
    %17 = vector.load %arg5[%c0_8, %c0_9] : memref<128x256xf32, #tpu.memory_space<vmem>>, vector<128x256xf32>
    %cst_10 = arith.constant dense<0.000000e+00> : vector<8x256xf32>
    %18 = tpu.matmul %16, %17, %cst_10 {dimension_numbers = #tpu.dot_dimension_numbers<[1], [0], [0], [1], [0, 0, 1, 1], [], []>} : vector<8x128xf32>, vector<128x256xf32>, vector<8x256xf32> -> vector<8x256xf32>
    %c0_11 = arith.constant 0 : index
    %c0_12 = arith.constant 0 : index
    %19 = vector.load %arg6[%c0_11, %c0_12] : memref<1x128xf32, #tpu.memory_space<vmem>>, vector<1x128xf32>
    %20 = vector.broadcast %19 : vector<1x128xf32> to vector<8x128xf32>
    %21 = arith.mulf %20, %9 : vector<8x128xf32>
    %c0_13 = arith.constant 0 : index
    %c0_14 = arith.constant 0 : index
    %22 = vector.load %arg3[%c0_13, %c0_14] : memref<8x4xf32, #tpu.memory_space<vmem>>, vector<8x1xf32>
    %c0_15 = arith.constant 0 : index
    %c1 = arith.constant 1 : index
    %23 = vector.load %arg3[%c0_15, %c1] : memref<8x4xf32, #tpu.memory_space<vmem>>, vector<8x1xf32>
    %c0_16 = arith.constant 0 : index
    %c2 = arith.constant 2 : index
    %24 = vector.load %arg3[%c0_16, %c2] : memref<8x4xf32, #tpu.memory_space<vmem>>, vector<8x1xf32>
    %25 = vector.broadcast %22 : vector<8x1xf32> to vector<8x128xf32>
    %26 = arith.mulf %21, %25 : vector<8x128xf32>
    %27 = arith.addf %26, %10 : vector<8x128xf32>
    %cst_17 = arith.constant 0.636619746 : f32
    %28 = vector.broadcast %cst_17 : f32 to vector<8x128xf32>
    %29 = arith.mulf %27, %28 : vector<8x128xf32>
    %cst_18 = arith.constant 5.000000e-01 : f32
    %30 = vector.broadcast %cst_18 : f32 to vector<8x128xf32>
    %31 = arith.addf %29, %30 : vector<8x128xf32>
    %32 = math.floor %31 : vector<8x128xf32>
    %cst_19 = arith.constant 1.5703125 : f32
    %33 = vector.broadcast %cst_19 : f32 to vector<8x128xf32>
    %34 = arith.mulf %32, %33 : vector<8x128xf32>
    %35 = arith.subf %27, %34 : vector<8x128xf32>
    %cst_20 = arith.constant 4.83751297E-4 : f32
    %36 = vector.broadcast %cst_20 : f32 to vector<8x128xf32>
    %37 = arith.mulf %32, %36 : vector<8x128xf32>
    %38 = arith.subf %35, %37 : vector<8x128xf32>
    %cst_21 = arith.constant 7.549790e-08 : f32
    %39 = vector.broadcast %cst_21 : f32 to vector<8x128xf32>
    %40 = arith.mulf %32, %39 : vector<8x128xf32>
    %41 = arith.subf %38, %40 : vector<8x128xf32>
    %42 = arith.fptosi %32 : vector<8x128xf32> to vector<8x128xi32>
    %c3_i32 = arith.constant 3 : i32
    %43 = vector.broadcast %c3_i32 : i32 to vector<8x128xi32>
    %44 = arith.andi %42, %43 : vector<8x128xi32>
    %45 = arith.mulf %41, %41 : vector<8x128xf32>
    %46 = arith.mulf %41, %45 : vector<8x128xf32>
    %cst_22 = arith.constant -1.95152956E-4 : f32
    %47 = vector.broadcast %cst_22 : f32 to vector<8x128xf32>
    %48 = arith.mulf %45, %47 : vector<8x128xf32>
    %cst_23 = arith.constant 0.00833216123 : f32
    %49 = vector.broadcast %cst_23 : f32 to vector<8x128xf32>
    %50 = arith.addf %49, %48 : vector<8x128xf32>
    %51 = arith.mulf %45, %50 : vector<8x128xf32>
    %cst_24 = arith.constant -0.166666552 : f32
    %52 = vector.broadcast %cst_24 : f32 to vector<8x128xf32>
    %53 = arith.addf %52, %51 : vector<8x128xf32>
    %54 = arith.mulf %46, %53 : vector<8x128xf32>
    %55 = arith.addf %41, %54 : vector<8x128xf32>
    %cst_25 = arith.constant 5.000000e-01 : f32
    %56 = vector.broadcast %cst_25 : f32 to vector<8x128xf32>
    %57 = arith.mulf %56, %45 : vector<8x128xf32>
    %cst_26 = arith.constant 1.000000e+00 : f32
    %58 = vector.broadcast %cst_26 : f32 to vector<8x128xf32>
    %59 = arith.subf %58, %57 : vector<8x128xf32>
    %60 = arith.mulf %45, %45 : vector<8x128xf32>
    %cst_27 = arith.constant 2.44331568E-5 : f32
    %61 = vector.broadcast %cst_27 : f32 to vector<8x128xf32>
    %62 = arith.mulf %45, %61 : vector<8x128xf32>
    %cst_28 = arith.constant -0.00138873165 : f32
    %63 = vector.broadcast %cst_28 : f32 to vector<8x128xf32>
    %64 = arith.addf %63, %62 : vector<8x128xf32>
    %65 = arith.mulf %45, %64 : vector<8x128xf32>
    %cst_29 = arith.constant 0.0416666456 : f32
    %66 = vector.broadcast %cst_29 : f32 to vector<8x128xf32>
    %67 = arith.addf %66, %65 : vector<8x128xf32>
    %68 = arith.mulf %60, %67 : vector<8x128xf32>
    %69 = arith.addf %59, %68 : vector<8x128xf32>
    %c1_i32 = arith.constant 1 : i32
    %70 = vector.broadcast %c1_i32 : i32 to vector<8x128xi32>
    %71 = arith.andi %44, %70 : vector<8x128xi32>
    %c1_i32_30 = arith.constant 1 : i32
    %72 = vector.broadcast %c1_i32_30 : i32 to vector<8x128xi32>
    %73 = arith.cmpi eq, %71, %72 : vector<8x128xi32>
    %74 = arith.select %73, %69, %55 : vector<8x128xi1>, vector<8x128xf32>
    %75 = arith.select %73, %55, %69 : vector<8x128xi1>, vector<8x128xf32>
    %c2_i32 = arith.constant 2 : i32
    %76 = vector.broadcast %c2_i32 : i32 to vector<8x128xi32>
    %77 = arith.andi %44, %76 : vector<8x128xi32>
    %c2_i32_31 = arith.constant 2 : i32
    %78 = vector.broadcast %c2_i32_31 : i32 to vector<8x128xi32>
    %79 = arith.cmpi eq, %77, %78 : vector<8x128xi32>
    %cst_32 = arith.constant 0.000000e+00 : f32
    %80 = vector.broadcast %cst_32 : f32 to vector<8x128xf32>
    %81 = arith.subf %80, %74 : vector<8x128xf32>
    %82 = arith.select %79, %81, %74 : vector<8x128xi1>, vector<8x128xf32>
    %c1_i32_33 = arith.constant 1 : i32
    %83 = vector.broadcast %c1_i32_33 : i32 to vector<8x128xi32>
    %84 = arith.addi %44, %83 : vector<8x128xi32>
    %c2_i32_34 = arith.constant 2 : i32
    %85 = vector.broadcast %c2_i32_34 : i32 to vector<8x128xi32>
    %86 = arith.andi %84, %85 : vector<8x128xi32>
    %c2_i32_35 = arith.constant 2 : i32
    %87 = vector.broadcast %c2_i32_35 : i32 to vector<8x128xi32>
    %88 = arith.cmpi eq, %86, %87 : vector<8x128xi32>
    %cst_36 = arith.constant 0.000000e+00 : f32
    %89 = vector.broadcast %cst_36 : f32 to vector<8x128xf32>
    %90 = arith.subf %89, %75 : vector<8x128xf32>
    %91 = arith.select %88, %90, %75 : vector<8x128xi1>, vector<8x128xf32>
    %92 = vector.broadcast %23 : vector<8x1xf32> to vector<8x128xf32>
    %93 = arith.mulf %21, %92 : vector<8x128xf32>
    %94 = arith.addf %93, %10 : vector<8x128xf32>
    %cst_37 = arith.constant 0.636619746 : f32
    %95 = vector.broadcast %cst_37 : f32 to vector<8x128xf32>
    %96 = arith.mulf %94, %95 : vector<8x128xf32>
    %cst_38 = arith.constant 5.000000e-01 : f32
    %97 = vector.broadcast %cst_38 : f32 to vector<8x128xf32>
    %98 = arith.addf %96, %97 : vector<8x128xf32>
    %99 = math.floor %98 : vector<8x128xf32>
    %cst_39 = arith.constant 1.5703125 : f32
    %100 = vector.broadcast %cst_39 : f32 to vector<8x128xf32>
    %101 = arith.mulf %99, %100 : vector<8x128xf32>
    %102 = arith.subf %94, %101 : vector<8x128xf32>
    %cst_40 = arith.constant 4.83751297E-4 : f32
    %103 = vector.broadcast %cst_40 : f32 to vector<8x128xf32>
    %104 = arith.mulf %99, %103 : vector<8x128xf32>
    %105 = arith.subf %102, %104 : vector<8x128xf32>
    %cst_41 = arith.constant 7.549790e-08 : f32
    %106 = vector.broadcast %cst_41 : f32 to vector<8x128xf32>
    %107 = arith.mulf %99, %106 : vector<8x128xf32>
    %108 = arith.subf %105, %107 : vector<8x128xf32>
    %109 = arith.fptosi %99 : vector<8x128xf32> to vector<8x128xi32>
    %c3_i32_42 = arith.constant 3 : i32
    %110 = vector.broadcast %c3_i32_42 : i32 to vector<8x128xi32>
    %111 = arith.andi %109, %110 : vector<8x128xi32>
    %112 = arith.mulf %108, %108 : vector<8x128xf32>
    %113 = arith.mulf %108, %112 : vector<8x128xf32>
    %cst_43 = arith.constant -1.95152956E-4 : f32
    %114 = vector.broadcast %cst_43 : f32 to vector<8x128xf32>
    %115 = arith.mulf %112, %114 : vector<8x128xf32>
    %cst_44 = arith.constant 0.00833216123 : f32
    %116 = vector.broadcast %cst_44 : f32 to vector<8x128xf32>
    %117 = arith.addf %116, %115 : vector<8x128xf32>
    %118 = arith.mulf %112, %117 : vector<8x128xf32>
    %cst_45 = arith.constant -0.166666552 : f32
    %119 = vector.broadcast %cst_45 : f32 to vector<8x128xf32>
    %120 = arith.addf %119, %118 : vector<8x128xf32>
    %121 = arith.mulf %113, %120 : vector<8x128xf32>
    %122 = arith.addf %108, %121 : vector<8x128xf32>
    %cst_46 = arith.constant 5.000000e-01 : f32
    %123 = vector.broadcast %cst_46 : f32 to vector<8x128xf32>
    %124 = arith.mulf %123, %112 : vector<8x128xf32>
    %cst_47 = arith.constant 1.000000e+00 : f32
    %125 = vector.broadcast %cst_47 : f32 to vector<8x128xf32>
    %126 = arith.subf %125, %124 : vector<8x128xf32>
    %127 = arith.mulf %112, %112 : vector<8x128xf32>
    %cst_48 = arith.constant 2.44331568E-5 : f32
    %128 = vector.broadcast %cst_48 : f32 to vector<8x128xf32>
    %129 = arith.mulf %112, %128 : vector<8x128xf32>
    %cst_49 = arith.constant -0.00138873165 : f32
    %130 = vector.broadcast %cst_49 : f32 to vector<8x128xf32>
    %131 = arith.addf %130, %129 : vector<8x128xf32>
    %132 = arith.mulf %112, %131 : vector<8x128xf32>
    %cst_50 = arith.constant 0.0416666456 : f32
    %133 = vector.broadcast %cst_50 : f32 to vector<8x128xf32>
    %134 = arith.addf %133, %132 : vector<8x128xf32>
    %135 = arith.mulf %127, %134 : vector<8x128xf32>
    %136 = arith.addf %126, %135 : vector<8x128xf32>
    %c1_i32_51 = arith.constant 1 : i32
    %137 = vector.broadcast %c1_i32_51 : i32 to vector<8x128xi32>
    %138 = arith.andi %111, %137 : vector<8x128xi32>
    %c1_i32_52 = arith.constant 1 : i32
    %139 = vector.broadcast %c1_i32_52 : i32 to vector<8x128xi32>
    %140 = arith.cmpi eq, %138, %139 : vector<8x128xi32>
    %141 = arith.select %140, %136, %122 : vector<8x128xi1>, vector<8x128xf32>
    %142 = arith.select %140, %122, %136 : vector<8x128xi1>, vector<8x128xf32>
    %c2_i32_53 = arith.constant 2 : i32
    %143 = vector.broadcast %c2_i32_53 : i32 to vector<8x128xi32>
    %144 = arith.andi %111, %143 : vector<8x128xi32>
    %c2_i32_54 = arith.constant 2 : i32
    %145 = vector.broadcast %c2_i32_54 : i32 to vector<8x128xi32>
    %146 = arith.cmpi eq, %144, %145 : vector<8x128xi32>
    %cst_55 = arith.constant 0.000000e+00 : f32
    %147 = vector.broadcast %cst_55 : f32 to vector<8x128xf32>
    %148 = arith.subf %147, %141 : vector<8x128xf32>
    %149 = arith.select %146, %148, %141 : vector<8x128xi1>, vector<8x128xf32>
    %c1_i32_56 = arith.constant 1 : i32
    %150 = vector.broadcast %c1_i32_56 : i32 to vector<8x128xi32>
    %151 = arith.addi %111, %150 : vector<8x128xi32>
    %c2_i32_57 = arith.constant 2 : i32
    %152 = vector.broadcast %c2_i32_57 : i32 to vector<8x128xi32>
    %153 = arith.andi %151, %152 : vector<8x128xi32>
    %c2_i32_58 = arith.constant 2 : i32
    %154 = vector.broadcast %c2_i32_58 : i32 to vector<8x128xi32>
    %155 = arith.cmpi eq, %153, %154 : vector<8x128xi32>
    %cst_59 = arith.constant 0.000000e+00 : f32
    %156 = vector.broadcast %cst_59 : f32 to vector<8x128xf32>
    %157 = arith.subf %156, %142 : vector<8x128xf32>
    %158 = arith.select %155, %157, %142 : vector<8x128xi1>, vector<8x128xf32>
    %159 = vector.broadcast %24 : vector<8x1xf32> to vector<8x128xf32>
    %160 = arith.mulf %21, %159 : vector<8x128xf32>
    %161 = arith.addf %160, %10 : vector<8x128xf32>
    %cst_60 = arith.constant 0.636619746 : f32
    %162 = vector.broadcast %cst_60 : f32 to vector<8x128xf32>
    %163 = arith.mulf %161, %162 : vector<8x128xf32>
    %cst_61 = arith.constant 5.000000e-01 : f32
    %164 = vector.broadcast %cst_61 : f32 to vector<8x128xf32>
    %165 = arith.addf %163, %164 : vector<8x128xf32>
    %166 = math.floor %165 : vector<8x128xf32>
    %cst_62 = arith.constant 1.5703125 : f32
    %167 = vector.broadcast %cst_62 : f32 to vector<8x128xf32>
    %168 = arith.mulf %166, %167 : vector<8x128xf32>
    %169 = arith.subf %161, %168 : vector<8x128xf32>
    %cst_63 = arith.constant 4.83751297E-4 : f32
    %170 = vector.broadcast %cst_63 : f32 to vector<8x128xf32>
    %171 = arith.mulf %166, %170 : vector<8x128xf32>
    %172 = arith.subf %169, %171 : vector<8x128xf32>
    %cst_64 = arith.constant 7.549790e-08 : f32
    %173 = vector.broadcast %cst_64 : f32 to vector<8x128xf32>
    %174 = arith.mulf %166, %173 : vector<8x128xf32>
    %175 = arith.subf %172, %174 : vector<8x128xf32>
    %176 = arith.fptosi %166 : vector<8x128xf32> to vector<8x128xi32>
    %c3_i32_65 = arith.constant 3 : i32
    %177 = vector.broadcast %c3_i32_65 : i32 to vector<8x128xi32>
    %178 = arith.andi %176, %177 : vector<8x128xi32>
    %179 = arith.mulf %175, %175 : vector<8x128xf32>
    %180 = arith.mulf %175, %179 : vector<8x128xf32>
    %cst_66 = arith.constant -1.95152956E-4 : f32
    %181 = vector.broadcast %cst_66 : f32 to vector<8x128xf32>
    %182 = arith.mulf %179, %181 : vector<8x128xf32>
    %cst_67 = arith.constant 0.00833216123 : f32
    %183 = vector.broadcast %cst_67 : f32 to vector<8x128xf32>
    %184 = arith.addf %183, %182 : vector<8x128xf32>
    %185 = arith.mulf %179, %184 : vector<8x128xf32>
    %cst_68 = arith.constant -0.166666552 : f32
    %186 = vector.broadcast %cst_68 : f32 to vector<8x128xf32>
    %187 = arith.addf %186, %185 : vector<8x128xf32>
    %188 = arith.mulf %180, %187 : vector<8x128xf32>
    %189 = arith.addf %175, %188 : vector<8x128xf32>
    %cst_69 = arith.constant 5.000000e-01 : f32
    %190 = vector.broadcast %cst_69 : f32 to vector<8x128xf32>
    %191 = arith.mulf %190, %179 : vector<8x128xf32>
    %cst_70 = arith.constant 1.000000e+00 : f32
    %192 = vector.broadcast %cst_70 : f32 to vector<8x128xf32>
    %193 = arith.subf %192, %191 : vector<8x128xf32>
    %194 = arith.mulf %179, %179 : vector<8x128xf32>
    %cst_71 = arith.constant 2.44331568E-5 : f32
    %195 = vector.broadcast %cst_71 : f32 to vector<8x128xf32>
    %196 = arith.mulf %179, %195 : vector<8x128xf32>
    %cst_72 = arith.constant -0.00138873165 : f32
    %197 = vector.broadcast %cst_72 : f32 to vector<8x128xf32>
    %198 = arith.addf %197, %196 : vector<8x128xf32>
    %199 = arith.mulf %179, %198 : vector<8x128xf32>
    %cst_73 = arith.constant 0.0416666456 : f32
    %200 = vector.broadcast %cst_73 : f32 to vector<8x128xf32>
    %201 = arith.addf %200, %199 : vector<8x128xf32>
    %202 = arith.mulf %194, %201 : vector<8x128xf32>
    %203 = arith.addf %193, %202 : vector<8x128xf32>
    %c1_i32_74 = arith.constant 1 : i32
    %204 = vector.broadcast %c1_i32_74 : i32 to vector<8x128xi32>
    %205 = arith.andi %178, %204 : vector<8x128xi32>
    %c1_i32_75 = arith.constant 1 : i32
    %206 = vector.broadcast %c1_i32_75 : i32 to vector<8x128xi32>
    %207 = arith.cmpi eq, %205, %206 : vector<8x128xi32>
    %208 = arith.select %207, %203, %189 : vector<8x128xi1>, vector<8x128xf32>
    %209 = arith.select %207, %189, %203 : vector<8x128xi1>, vector<8x128xf32>
    %c2_i32_76 = arith.constant 2 : i32
    %210 = vector.broadcast %c2_i32_76 : i32 to vector<8x128xi32>
    %211 = arith.andi %178, %210 : vector<8x128xi32>
    %c2_i32_77 = arith.constant 2 : i32
    %212 = vector.broadcast %c2_i32_77 : i32 to vector<8x128xi32>
    %213 = arith.cmpi eq, %211, %212 : vector<8x128xi32>
    %cst_78 = arith.constant 0.000000e+00 : f32
    %214 = vector.broadcast %cst_78 : f32 to vector<8x128xf32>
    %215 = arith.subf %214, %208 : vector<8x128xf32>
    %216 = arith.select %213, %215, %208 : vector<8x128xi1>, vector<8x128xf32>
    %c1_i32_79 = arith.constant 1 : i32
    %217 = vector.broadcast %c1_i32_79 : i32 to vector<8x128xi32>
    %218 = arith.addi %178, %217 : vector<8x128xi32>
    %c2_i32_80 = arith.constant 2 : i32
    %219 = vector.broadcast %c2_i32_80 : i32 to vector<8x128xi32>
    %220 = arith.andi %218, %219 : vector<8x128xi32>
    %c2_i32_81 = arith.constant 2 : i32
    %221 = vector.broadcast %c2_i32_81 : i32 to vector<8x128xi32>
    %222 = arith.cmpi eq, %220, %221 : vector<8x128xi32>
    %cst_82 = arith.constant 0.000000e+00 : f32
    %223 = vector.broadcast %cst_82 : f32 to vector<8x128xf32>
    %224 = arith.subf %223, %209 : vector<8x128xf32>
    %225 = arith.select %222, %224, %209 : vector<8x128xi1>, vector<8x128xf32>
    %226 = vector.broadcast %3 : vector<8x1xf32> to vector<8x128xf32>
    %227 = arith.mulf %149, %226 : vector<8x128xf32>
    %228 = vector.broadcast %1 : vector<8x1xf32> to vector<8x128xf32>
    %229 = arith.mulf %216, %228 : vector<8x128xf32>
    %230 = arith.addf %227, %229 : vector<8x128xf32>
    %231 = arith.subf %82, %230 : vector<8x128xf32>
    %232 = vector.extract_strided_slice %18 {offsets = [0, 0], sizes = [8, 128], strides = [1, 1]} : vector<8x256xf32> to vector<8x128xf32>
    %233 = arith.addf %231, %232 : vector<8x128xf32>
    %c0_83 = arith.constant 0 : index
    %c0_84 = arith.constant 0 : index
    %234 = vector.load %arg7[%c0_83, %c0_84] : memref<8x256xf32, #tpu.memory_space<vmem>>, vector<8x128xf32>
    tpu.vector_store %arg7[%c0_83, %c0_84], %233 {strides = array<i32>} : memref<8x256xf32, #tpu.memory_space<vmem>>, vector<8x128xf32>,
    %235 = vector.broadcast %3 : vector<8x1xf32> to vector<8x128xf32>
    %236 = arith.mulf %158, %235 : vector<8x128xf32>
    %237 = vector.broadcast %1 : vector<8x1xf32> to vector<8x128xf32>
    %238 = arith.mulf %225, %237 : vector<8x128xf32>
    %239 = arith.addf %236, %238 : vector<8x128xf32>
    %240 = arith.subf %91, %239 : vector<8x128xf32>
    %241 = vector.extract_strided_slice %18 {offsets = [0, 128], sizes = [8, 128], strides = [1, 1]} : vector<8x256xf32> to vector<8x128xf32>
    %242 = arith.addf %240, %241 : vector<8x128xf32>
    %c0_85 = arith.constant 0 : index
    %c128 = arith.constant 128 : index
    %243 = vector.load %arg7[%c0_85, %c128] : memref<8x256xf32, #tpu.memory_space<vmem>>, vector<8x128xf32>
    tpu.vector_store %arg7[%c0_85, %c128], %242 {strides = array<i32>} : memref<8x256xf32, #tpu.memory_space<vmem>>, vector<8x128xf32>,
    return
  }
  func.func @transform_0(%arg0: i32) -> (i32, i32) {
    %c0_i32 = arith.constant 0 : i32
    %c0_i32_0 = arith.constant 0 : i32
    return %arg0, %c0_i32 : i32, i32
  }
  func.func @transform_1(%arg0: i32) -> (i32, i32) {
    %c0_i32 = arith.constant 0 : i32
    %c0_i32_0 = arith.constant 0 : i32
    return %arg0, %c0_i32 : i32, i32
  }
  func.func @transform_2(%arg0: i32) -> (i32, i32) {
    %c0_i32 = arith.constant 0 : i32
    %c0_i32_0 = arith.constant 0 : i32
    return %arg0, %c0_i32 : i32, i32
  }
  func.func @transform_3(%arg0: i32) -> (i32, i32) {
    %c0_i32 = arith.constant 0 : i32
    %c0_i32_0 = arith.constant 0 : i32
    %c0_i32_1 = arith.constant 0 : i32
    return %c0_i32, %c0_i32_0 : i32, i32
  }
  func.func @transform_4(%arg0: i32) -> (i32, i32) {
    %c0_i32 = arith.constant 0 : i32
    %c0_i32_0 = arith.constant 0 : i32
    %c0_i32_1 = arith.constant 0 : i32
    return %c0_i32, %c0_i32_0 : i32, i32
  }
  func.func @transform_5(%arg0: i32) -> (i32, i32) {
    %c0_i32 = arith.constant 0 : i32
    %c0_i32_0 = arith.constant 0 : i32
    %c0_i32_1 = arith.constant 0 : i32
    return %c0_i32, %c0_i32_0 : i32, i32
  }
  func.func @transform_6(%arg0: i32) -> (i32, i32) {
    %c0_i32 = arith.constant 0 : i32
    %c0_i32_0 = arith.constant 0 : i32
    return %arg0, %c0_i32 : i32, i32
  }
}

</mosaic_0001>

<llo_original>
// kernel: tpu_custom_call.1
$region0: #{tpu_custom_call.1}
  #allocation0 [shape = 'u32[]', space=smem, size = 0x4, offset = 0x4, fixed_abs, tag = 'smem constant byte address 0x4 - core index']
  #allocation1 [shape = 'u32[144,128]{1,0:T(1,128)}', space=vmem, size = 0x12000, scoped, tag = 'internal scratch']
  %s0 = inlined_call_operand.vmem [shape: f32[16,128], index: 0, kind: input, shape index: {}]
  %s1 = inlined_call_operand.hbm [shape: f32[16,128], index: 1, kind: input, shape index: {}]
  %s2 = inlined_call_operand.vmem [shape: f32[16,4], index: 2, kind: input, shape index: {}]
  %s3 = inlined_call_operand.hbm [shape: f32[128,256], index: 3, kind: input, shape index: {}]
  %s4 = inlined_call_operand.hbm [shape: f32[128,256], index: 4, kind: input, shape index: {}]
  %s5 = inlined_call_operand.vmem [shape: f32[1,128], index: 5, kind: input, shape index: {}]
  %s6 = inlined_call_operand.hbm [shape: f32[16,256], index: 6, kind: output, shape index: {}]
  %s7 = sld [smem:[#allocation0]]
  $region69: #{tpu_custom_call.1} parent=0
    _
  %s9 = ssub.s32 1, %s7
  %s10 = scalar_select 0, %s9, %s7
  $region1: #{tpu_custom_call.1} parent=0
    #allocation2 [shape = 'u8[8192]{0}', space=vmem, size = 0x2000, scoped, tag = 'input window, operand 1']
    #allocation3 [shape = 's32[2]{0}', space=sflag, size = 0x8, scoped, tag = 'scoped memory for tpu_custom_call.1']
    #allocation4 [shape = 's32[2]{0}', space=sflag, size = 0x8, scoped, tag = 'scoped memory for tpu_custom_call.1']
    #allocation5 [shape = 'u8[131072]{0}', space=vmem, size = 0x20000, scoped, tag = 'input window, operand 3, single buffered']
    #allocation6 [shape = 's32[1]{0}', space=sflag, size = 0x4, scoped, tag = 'scoped memory for tpu_custom_call.1']
    #allocation7 [shape = 'u8[131072]{0}', space=vmem, size = 0x20000, scoped, tag = 'input window, operand 4, single buffered']
    #allocation8 [shape = 'u8[16384]{0}', space=vmem, size = 0x4000, scoped, tag = 'output window, operand 0']
    %11 = vsyncpa [#allocation3], 0
    %s12 = scalar_lea.sflag [#allocation3], 1
    %13 = vsyncpa %s12, 0
    %14 = vsyncpa [#allocation6], 0
    %15 = vsyncpa [#allocation4], 0
    %s16 = scalar_lea.sflag [#allocation4], 1
    %17 = vsyncpa %s16, 0
    loop: start=0, step=1, limit=4
    $region2: #{tpu_custom_call.1} parent=1 // loop_pre_header
      _
    $region3: #{tpu_custom_call.1} parent=1 // loop_header
      %s19 = sphi 0, %s23
      %p20 = scmp.ge.s32.totalorder %s19, 4
      %s29 = sphi 0, %s31
      %s32 = sphi 0, %s29
      %s33 = sphi 0, %s32
      %s49 = sphi 0, %s33
      %s55 = sphi 0, %s57
      %s58 = sphi 0, %s55
      %s59 = sphi 0, %s58
      %s75 = sphi 0, %s59
      %s81 = sphi 0, %s83
      %s84 = sphi 0, %s81
      %s85 = sphi 0, %s84
      %s101 = sphi 0, %s85
      %s105 = sphi 0, %s105
      %s107 = sphi 0, %s105
      %s108 = sphi 0, %s107
      %s122 = sphi 0, %s108
      %s126 = sphi 0, %s126
      %s128 = sphi 0, %s126
      %s129 = sphi 0, %s128
      %s143 = sphi 0, %s129
      %s147 = sphi 0, %s147
      %s149 = sphi 0, %s147
      %s150 = sphi 0, %s149
      %s164 = sphi 0, %s150
      %s170 = sphi 0, %s172
      %s173 = sphi 0, %s170
      %s174 = sphi 0, %s173
      %s190 = sphi 0, %s174
    $region4: #{tpu_custom_call.1} parent=1 // loop_header_branch
      %22 = sbr.rel (%p20) target = $region8
    $region5: #{tpu_custom_call.1} parent=1 // loop_body
      %s24 = ssub.s32 %s19, 1
      %s25 = ssub.s32 %s19, 2
      %s26 = sadd.s32 %s19, 1
      %s27 = ssub.s32 %s19, %s26
      %p28 = scmp.eq.s32.totalorder %s27, 0
      %s30 = sadd.s32 %s29, 1
      %s31 = scalar_select %p28, %s29, %s30
      %p34 = pneg %p28
      %p35 = scmp.eq.s32.totalorder %s19, 1
      %p36 = por %p34, %p35
      %p37 = scmp.ne.s32.totalorder %s29, %s32
      %p38 = scmp.eq.s32.totalorder %s19, 0
      %p39 = por %p37, %p38
      %p40 = scmp.ne.s32.totalorder %s29, %s32
      %p41 = scmp.eq.s32.totalorder %s24, 1
      %p42 = por %p40, %p41
      %p43 = scmp.ne.s32.totalorder %s32, %s33
      %p44 = scmp.eq.s32.totalorder %s24, 0
      %p45 = por %p43, %p44
      %p46 = scmp.ne.s32.totalorder %s32, %s33
      %p47 = scmp.eq.s32.totalorder %s25, 1
      %p48 = por %p46, %p47
      %p50 = scmp.ne.s32.totalorder %s33, %s49
      %p51 = scmp.eq.s32.totalorder %s25, 0
      %p52 = por %p50, %p51
      %s53 = ssub.s32 %s19, %s26
      %p54 = scmp.eq.s32.totalorder %s53, 0
      %s56 = sadd.s32 %s55, 1
      %s57 = scalar_select %p54, %s55, %s56
      %p60 = pneg %p54
      %p61 = scmp.eq.s32.totalorder %s19, 1
      %p62 = por %p60, %p61
      %p63 = scmp.ne.s32.totalorder %s55, %s58
      %p64 = scmp.eq.s32.totalorder %s19, 0
      %p65 = por %p63, %p64
      %p66 = scmp.ne.s32.totalorder %s55, %s58
      %p67 = scmp.eq.s32.totalorder %s24, 1
      %p68 = por %p66, %p67
      %p69 = scmp.ne.s32.totalorder %s58, %s59
      %p70 = scmp.eq.s32.totalorder %s24, 0
      %p71 = por %p69, %p70
      %p72 = scmp.ne.s32.totalorder %s58, %s59
      %p73 = scmp.eq.s32.totalorder %s25, 1
      %p74 = por %p72, %p73
      %p76 = scmp.ne.s32.totalorder %s59, %s75
      %p77 = scmp.eq.s32.totalorder %s25, 0
      %p78 = por %p76, %p77
      %s79 = ssub.s32 %s19, %s26
      %p80 = scmp.eq.s32.totalorder %s79, 0
      %s82 = sadd.s32 %s81, 1
      %s83 = scalar_select %p80, %s81, %s82
      %p86 = pneg %p80
      %p87 = scmp.eq.s32.totalorder %s19, 1
      %p88 = por %p86, %p87
      %p89 = scmp.ne.s32.totalorder %s81, %s84
      %p90 = scmp.eq.s32.totalorder %s19, 0
      %p91 = por %p89, %p90
      %p92 = scmp.ne.s32.totalorder %s81, %s84
      %p93 = scmp.eq.s32.totalorder %s24, 1
      %p94 = por %p92, %p93
      %p95 = scmp.ne.s32.totalorder %s84, %s85
      %p96 = scmp.eq.s32.totalorder %s24, 0
      %p97 = por %p95, %p96
      %p98 = scmp.ne.s32.totalorder %s84, %s85
      %p99 = scmp.eq.s32.totalorder %s25, 1
      %p100 = por %p98, %p99
      %p102 = scmp.ne.s32.totalorder %s85, %s101
      %p103 = scmp.eq.s32.totalorder %s25, 0
      %p104 = por %p102, %p103
      %s106 = sadd.s32 %s105, 1
      %p109 = scmp.eq.s32.totalorder %s19, 1
      %p110 = scmp.ne.s32.totalorder %s105, %s107
      %p111 = scmp.eq.s32.totalorder %s19, 0
      %p112 = por %p110, %p111
      %p113 = scmp.ne.s32.totalorder %s105, %s107
      %p114 = scmp.eq.s32.totalorder %s24, 1
      %p115 = por %p113, %p114
      %p116 = scmp.ne.s32.totalorder %s107, %s108
      %p117 = scmp.eq.s32.totalorder %s24, 0
      %p118 = por %p116, %p117
      %p119 = scmp.ne.s32.totalorder %s107, %s108
      %p120 = scmp.eq.s32.totalorder %s25, 1
      %p121 = por %p119, %p120
      %p123 = scmp.ne.s32.totalorder %s108, %s122
      %p124 = scmp.eq.s32.totalorder %s25, 0
      %p125 = por %p123, %p124
      %s127 = sadd.s32 %s126, 1
      %p130 = scmp.eq.s32.totalorder %s19, 1
      %p131 = scmp.ne.s32.totalorder %s126, %s128
      %p132 = scmp.eq.s32.totalorder %s19, 0
      %p133 = por %p131, %p132
      %p134 = scmp.ne.s32.totalorder %s126, %s128
      %p135 = scmp.eq.s32.totalorder %s24, 1
      %p136 = por %p134, %p135
      %p137 = scmp.ne.s32.totalorder %s128, %s129
      %p138 = scmp.eq.s32.totalorder %s24, 0
      %p139 = por %p137, %p138
      %p140 = scmp.ne.s32.totalorder %s128, %s129
      %p141 = scmp.eq.s32.totalorder %s25, 1
      %p142 = por %p140, %p141
      %p144 = scmp.ne.s32.totalorder %s129, %s143
      %p145 = scmp.eq.s32.totalorder %s25, 0
      %p146 = por %p144, %p145
      %s148 = sadd.s32 %s147, 1
      %p151 = scmp.eq.s32.totalorder %s19, 1
      %p152 = scmp.ne.s32.totalorder %s147, %s149
      %p153 = scmp.eq.s32.totalorder %s19, 0
      %p154 = por %p152, %p153
      %p155 = scmp.ne.s32.totalorder %s147, %s149
      %p156 = scmp.eq.s32.totalorder %s24, 1
      %p157 = por %p155, %p156
      %p158 = scmp.ne.s32.totalorder %s149, %s150
      %p159 = scmp.eq.s32.totalorder %s24, 0
      %p160 = por %p158, %p159
      %p161 = scmp.ne.s32.totalorder %s149, %s150
      %p162 = scmp.eq.s32.totalorder %s25, 1
      %p163 = por %p161, %p162
      %p165 = scmp.ne.s32.totalorder %s150, %s164
      %p166 = scmp.eq.s32.totalorder %s25, 0
      %p167 = por %p165, %p166
      %s168 = ssub.s32 %s19, %s26
      %p169 = scmp.eq.s32.totalorder %s168, 0
      %s171 = sadd.s32 %s170, 1
      %s172 = scalar_select %p169, %s170, %s171
      %p175 = pneg %p169
      %p176 = scmp.eq.s32.totalorder %s19, 1
      %p177 = por %p175, %p176
      %p178 = scmp.ne.s32.totalorder %s170, %s173
      %p179 = scmp.eq.s32.totalorder %s19, 0
      %p180 = por %p178, %p179
      %p181 = scmp.ne.s32.totalorder %s170, %s173
      %p182 = scmp.eq.s32.totalorder %s24, 1
      %p183 = por %p181, %p182
      %p184 = scmp.ne.s32.totalorder %s173, %s174
      %p185 = scmp.eq.s32.totalorder %s24, 0
      %p186 = por %p184, %p185
      %p187 = scmp.ne.s32.totalorder %s173, %s174
      %p188 = scmp.eq.s32.totalorder %s25, 1
      %p189 = por %p187, %p188
      %p191 = scmp.ne.s32.totalorder %s174, %s190
      %p192 = scmp.eq.s32.totalorder %s25, 0
      %p193 = por %p191, %p192
      %p194 = scmp.le.s32.totalorder 1, %s19
      %p195 = scmp.lt.s32.totalorder %s19, 3
      %p196 = pnand %p194, %p195
      %p197 = pneg %p196
      // Predicated region
      $region9: #{tpu_custom_call.1} parent=5 // pred_check
        _
      $region10: #{tpu_custom_call.1} parent=5 // pred_check_branch
        %199 = sbr.rel (%p196) target = $region12
      $region11: #{tpu_custom_call.1} parent=5 // pred_region
        %s200 = ssub.s32 %s19, 1
        // Predicated region
        $region13: #{tpu_custom_call.1} parent=11 // pred_check
          %p201 = pneg %p118
        $region14: #{tpu_custom_call.1} parent=11 // pred_check_branch
          %203 = sbr.rel (%p201) target = $region16
        $region15: #{tpu_custom_call.1} parent=11 // pred_region
          %s205 = ssub.s32 4096, 4096
          %206 = vsyncadd [#allocation6], %s205
          %s207 = sshll.u32 [#allocation5], 4
          %s208 = int_to_ptr.vmem [resolvable:$true] %s207
          %213 = dma.hbm_to_vmem [thread:$0]  %s3, 4096, %s208, [#allocation6], 256, 256, 16
        $region16: #{tpu_custom_call.1} parent=11 // pred_fallthru
          _
        // Predicated region
        $region17: #{tpu_custom_call.1} parent=11 // pred_check
          %p214 = pneg %p139
        $region18: #{tpu_custom_call.1} parent=11 // pred_check_branch
          %216 = sbr.rel (%p214) target = $region20
        $region19: #{tpu_custom_call.1} parent=11 // pred_region
          %s218 = ssub.s32 4096, 4096
          %219 = vsyncadd [#allocation6], %s218
          %s220 = sshll.u32 [#allocation7], 4
          %s221 = int_to_ptr.vmem [resolvable:$true] %s220
          %226 = dma.hbm_to_vmem [thread:$0]  %s4, 4096, %s221, [#allocation6], 256, 256, 16
        $region20: #{tpu_custom_call.1} parent=11 // pred_fallthru
          _
        // Predicated region
        $region21: #{tpu_custom_call.1} parent=11 // pred_check
          %p227 = pneg %p160
        $region22: #{tpu_custom_call.1} parent=11 // pred_check_branch
          %229 = sbr.rel (%p227) target = $region24
        $region23: #{tpu_custom_call.1} parent=11 // pred_region
          _
        $region24: #{tpu_custom_call.1} parent=11 // pred_fallthru
          _
      $region12: #{tpu_custom_call.1} parent=5 // pred_fallthru
        _
      %p230 = scmp.lt.s32.totalorder %s19, 2
      // Predicated region
      $region25: #{tpu_custom_call.1} parent=5 // pred_check
        %p231 = pneg %p230
      $region26: #{tpu_custom_call.1} parent=5 // pred_check_branch
        %233 = sbr.rel (%p231) target = $region28
      $region27: #{tpu_custom_call.1} parent=5 // pred_region
        // Predicated region
        $region29: #{tpu_custom_call.1} parent=27 // pred_check
          %p234 = pneg %p39
        $region30: #{tpu_custom_call.1} parent=27 // pred_check_branch
          %236 = sbr.rel (%p234) target = $region32
        $region31: #{tpu_custom_call.1} parent=27 // pred_region
          %p237 = scmp.lt.s32.totalorder %s19, 1
          %s238 = scalar_select %p237, %s19, 1
          %s239 = smul.addr %s238, 8
          %s240 = scalar_lea.vmem %s0, %s239
        $region32: #{tpu_custom_call.1} parent=27 // pred_fallthru
          _
        // Predicated region
        $region33: #{tpu_custom_call.1} parent=27 // pred_check
          %p241 = pneg %p65
        $region34: #{tpu_custom_call.1} parent=27 // pred_check_branch
          %243 = sbr.rel (%p241) target = $region36
        $region35: #{tpu_custom_call.1} parent=27 // pred_region
          %s244 = sand.u32 %s55, 1
          %s245 = scalar_lea.sflag [#allocation3], %s244
          %s246 = sand.u32 %s55, 1
          %s247 = smul.addr %s246, 8
          %s248 = scalar_lea.vmem [#allocation2], %s247
          %s250 = ssub.s32 128, 128
          %251 = vsyncadd %s245, %s250
          %s252 = smul.addr %s19, 128
          %s253 = scalar_lea.hbm %s1, %s252
          %s255 = sshll.u32 %s248, 4
          %s256 = int_to_ptr.vmem [resolvable:$true] %s255
          %258 = dma.hbm_to_vmem [thread:$0]  %s253, 128, %s256, %s245
        $region36: #{tpu_custom_call.1} parent=27 // pred_fallthru
          _
        // Predicated region
        $region37: #{tpu_custom_call.1} parent=27 // pred_check
          %p259 = pneg %p91
        $region38: #{tpu_custom_call.1} parent=27 // pred_check_branch
          %261 = sbr.rel (%p259) target = $region40
        $region39: #{tpu_custom_call.1} parent=27 // pred_region
          %p262 = scmp.lt.s32.totalorder %s19, 1
          %s263 = scalar_select %p262, %s19, 1
          %s264 = smul.addr %s263, 8
          %s265 = scalar_lea.vmem %s2, %s264
        $region40: #{tpu_custom_call.1} parent=27 // pred_fallthru
          _
      $region28: #{tpu_custom_call.1} parent=5 // pred_fallthru
        _
      %p266 = scmp.le.s32.totalorder 1, %s19
      %p267 = scmp.lt.s32.totalorder %s19, 3
      %p268 = pnand %p266, %p267
      %p269 = pneg %p268
      // Predicated region
      $region41: #{tpu_custom_call.1} parent=5 // pred_check
        _
      $region42: #{tpu_custom_call.1} parent=5 // pred_check_branch
        %271 = sbr.rel (%p268) target = $region44
      $region43: #{tpu_custom_call.1} parent=5 // pred_region
        %s272 = ssub.s32 %s19, 1
        %s273 = sand.u32 %s58, 1
        %s274 = scalar_lea.sflag [#allocation3], %s273
        %s275 = sand.u32 %s58, 1
        %s276 = smul.addr %s275, 8
        %s277 = scalar_lea.vmem [#allocation2], %s276
        // Predicated region
        $region45: #{tpu_custom_call.1} parent=43 // pred_check
          %p278 = pneg %p71
        $region46: #{tpu_custom_call.1} parent=43 // pred_check_branch
          %280 = sbr.rel (%p278) target = $region48
        $region47: #{tpu_custom_call.1} parent=43 // pred_region
          %281 = dma.done %s274, 128
        $region48: #{tpu_custom_call.1} parent=43 // pred_fallthru
          _
        // Predicated region
        $region49: #{tpu_custom_call.1} parent=43 // pred_check
          %p282 = pneg %p118
        $region50: #{tpu_custom_call.1} parent=43 // pred_check_branch
          %284 = sbr.rel (%p282) target = $region52
        $region51: #{tpu_custom_call.1} parent=43 // pred_region
          %285 = dma.done [#allocation6], 4096
        $region52: #{tpu_custom_call.1} parent=43 // pred_fallthru
          _
        // Predicated region
        $region53: #{tpu_custom_call.1} parent=43 // pred_check
          %p286 = pneg %p139
        $region54: #{tpu_custom_call.1} parent=43 // pred_check_branch
          %288 = sbr.rel (%p286) target = $region56
        $region55: #{tpu_custom_call.1} parent=43 // pred_region
          %289 = dma.done [#allocation6], 4096
        $region56: #{tpu_custom_call.1} parent=43 // pred_fallthru
          _
        %p290 = scmp.lt.s32.totalorder %s24, 1
        %s291 = scalar_select %p290, %s24, 1
        %s292 = smul.addr %s291, 8
        %s293 = scalar_lea.vmem %s0, %s292
        %p294 = pneg %p45
        %p295 = pneg %p42
        %s296 = sand.u32 %s58, 1
        %s297 = scalar_lea.sflag [#allocation3], %s296
        %s298 = sand.u32 %s58, 1
        %s299 = smul.addr %s298, 8
        %s300 = scalar_lea.vmem [#allocation2], %s299
        %p301 = pneg %p71
        %p302 = pneg %p68
        %p303 = scmp.lt.s32.totalorder %s24, 1
        %s304 = scalar_select %p303, %s24, 1
        %s305 = smul.addr %s304, 8
        %s306 = scalar_lea.vmem %s2, %s305
        %p307 = pneg %p97
        %p308 = pneg %p94
        %p309 = pneg %p118
        %p310 = pneg %p115
        %p311 = pneg %p139
        %p312 = pneg %p136
        %p313 = pneg %p160
        %p314 = pneg %p157
        %p315 = pneg %p186
        %p316 = pneg %p183
        %s317 = sand.u32 %s173, 1
        %s318 = scalar_lea.sflag [#allocation4], %s317
        %s319 = sand.u32 %s173, 1
        %s320 = smul.addr %s319, 16
        %s321 = scalar_lea.vmem [#allocation8], %s320
        %p322 = scmp.lt.s32.totalorder %s24, 1
        %s323 = scalar_select %p322, %s24, 1
        %s324 = smul.addr %s323, 8
        %s325 = scalar_lea.vmem %s0, %s324
        %p326 = scmp.lt.s32.totalorder %s24, 1
        %s327 = scalar_select %p326, %s24, 1
        %s328 = smul.addr %s327, 8
        %s329 = scalar_lea.vmem %s2, %s328
        %v330 = vld [vmem:[%s325] sm:$0xff]
        %v331 = vld [vmem:[%s329] sm:$0xff]
        %v332 = vsub.f32 1.0, %v331
        %v333 = vld [vmem:[#allocation5] sm:$0xff]
        %v334 = vld [vmem:[#allocation5 + $0x8] sm:$0xff]
        %v335 = vld [vmem:[#allocation5 + $0x10] sm:$0xff]
        %v336 = vld [vmem:[#allocation5 + $0x18] sm:$0xff]
        %v337 = vld [vmem:[#allocation5 + $0x20] sm:$0xff]
        %v338 = vld [vmem:[#allocation5 + $0x28] sm:$0xff]
        %v339 = vld [vmem:[#allocation5 + $0x30] sm:$0xff]
        %v340 = vld [vmem:[#allocation5 + $0x38] sm:$0xff]
        %v341 = vld [vmem:[#allocation5 + $0x40] sm:$0xff]
        %v342 = vld [vmem:[#allocation5 + $0x48] sm:$0xff]
        %v343 = vld [vmem:[#allocation5 + $0x50] sm:$0xff]
        %v344 = vld [vmem:[#allocation5 + $0x58] sm:$0xff]
        %v345 = vld [vmem:[#allocation5 + $0x60] sm:$0xff]
        %v346 = vld [vmem:[#allocation5 + $0x68] sm:$0xff]
        %v347 = vld [vmem:[#allocation5 + $0x70] sm:$0xff]
        %v348 = vld [vmem:[#allocation5 + $0x78] sm:$0xff]
        %v349 = vld [vmem:[#allocation5 + $0x80] sm:$0xff]
        %v350 = vld [vmem:[#allocation5 + $0x88] sm:$0xff]
        %v351 = vld [vmem:[#allocation5 + $0x90] sm:$0xff]
        %v352 = vld [vmem:[#allocation5 + $0x98] sm:$0xff]
        %v353 = vld [vmem:[#allocation5 + $0xa0] sm:$0xff]
        %v354 = vld [vmem:[#allocation5 + $0xa8] sm:$0xff]
        %v355 = vld [vmem:[#allocation5 + $0xb0] sm:$0xff]
        %v356 = vld [vmem:[#allocation5 + $0xb8] sm:$0xff]
        %v357 = vld [vmem:[#allocation5 + $0xc0] sm:$0xff]
        %v358 = vld [vmem:[#allocation5 + $0xc8] sm:$0xff]
        %v359 = vld [vmem:[#allocation5 + $0xd0] sm:$0xff]
        %v360 = vld [vmem:[#allocation5 + $0xd8] sm:$0xff]
        %v361 = vld [vmem:[#allocation5 + $0xe0] sm:$0xff]
        %v362 = vld [vmem:[#allocation5 + $0xe8] sm:$0xff]
        %v363 = vld [vmem:[#allocation5 + $0xf0] sm:$0xff]
        %v364 = vld [vmem:[#allocation5 + $0xf8] sm:$0xff]
        %365 = vmatprep.subr.mxu0 %v334
        %366 = vmatpush1.msra.mxu0 %v333
        %367 = vmatprep.subr.mxu0 %v336
        %368 = vmatpush1.msra.mxu0 %v335
        %369 = vmatprep.subr.mxu0 %v338
        %370 = vmatpush1.msra.mxu0 %v337
        %371 = vmatprep.subr.mxu0 %v340
        %372 = vmatpush1.msra.mxu0 %v339
        %373 = vmatprep.subr.mxu0 %v342
        %374 = vmatpush1.msra.mxu0 %v341
        %375 = vmatprep.subr.mxu0 %v344
        %376 = vmatpush1.msra.mxu0 %v343
        %377 = vmatprep.subr.mxu0 %v346
        %378 = vmatpush1.msra.mxu0 %v345
        %379 = vmatprep.subr.mxu0 %v348
        %380 = vmatpush1.msra.mxu0 %v347
        %381 = vmatprep.subr.mxu0 %v350
        %382 = vmatpush1.msra.mxu0 %v349
        %383 = vmatprep.subr.mxu0 %v352
        %384 = vmatpush1.msra.mxu0 %v351
        %385 = vmatprep.subr.mxu0 %v354
        %386 = vmatpush1.msra.mxu0 %v353
        %387 = vmatprep.subr.mxu0 %v356
        %388 = vmatpush1.msra.mxu0 %v355
        %389 = vmatprep.subr.mxu0 %v358
        %390 = vmatpush1.msra.mxu0 %v357
        %391 = vmatprep.subr.mxu0 %v360
        %392 = vmatpush1.msra.mxu0 %v359
        %393 = vmatprep.subr.mxu0 %v362
        %394 = vmatpush1.msra.mxu0 %v361
        %395 = vmatprep.subr.mxu0 %v364
        %396 = vmatpush1.msra.mxu0 %v363
        %397 = vmatprep.subr.mxu0 0.0
        %398 = vmatpush1.msra.mxu0 0.0
        %399 = vmatprep.subr.mxu0 0.0
        %400 = vmatpush1.msra.mxu0 0.0
        %401 = vmatprep.subr.mxu0 0.0
        %402 = vmatpush1.msra.mxu0 0.0
        %403 = vmatprep.subr.mxu0 0.0
        %404 = vmatpush1.msra.mxu0 0.0
        %405 = vmatprep.subr.mxu0 0.0
        %406 = vmatpush1.msra.mxu0 0.0
        %407 = vmatprep.subr.mxu0 0.0
        %408 = vmatpush1.msra.mxu0 0.0
        %409 = vmatprep.subr.mxu0 0.0
        %410 = vmatpush1.msra.mxu0 0.0
        %411 = vmatprep.subr.mxu0 0.0
        %412 = vmatpush1.msra.mxu0 0.0
        %413 = vmatprep.subr.mxu0 0.0
        %414 = vmatpush1.msra.mxu0 0.0
        %415 = vmatprep.subr.mxu0 0.0
        %416 = vmatpush1.msra.mxu0 0.0
        %417 = vmatprep.subr.mxu0 0.0
        %418 = vmatpush1.msra.mxu0 0.0
        %419 = vmatprep.subr.mxu0 0.0
        %420 = vmatpush1.msra.mxu0 0.0
        %421 = vmatprep.subr.mxu0 0.0
        %422 = vmatpush1.msra.mxu0 0.0
        %423 = vmatprep.subr.mxu0 0.0
        %424 = vmatpush1.msra.mxu0 0.0
        %425 = vmatprep.subr.mxu0 0.0
        %426 = vmatpush1.msra.mxu0 0.0
        %427 = vmatprep.subr.mxu0 0.0
        %428 = vmatpush1.msra.mxu0 0.0
        %429 = vmatprep.mubr.f32.mxu0 0.0
        %430 = vmatmul.mubr.f32.gmra.mrb[0].mxu0 %v330
        %v431 = vpop.f32.mrb[0].mxu0
        %v432 = vadd.f32 0.0, %v431
        %v433 = vpop.f32.mrb[0].mxu0
        %v434 = vadd.f32 0.0, %v433
        %435 = vdwg.mxu0
        %v436 = vtanh.pop %v432
        %v437 = vadd.f32 %v436, 1.0
        %439 = vset.pattern.permute.xlu0 3
        %440 = vperm.xlu0 %439, %v332
        %v441 = vpop.permute.xlu0 %440
        %v443 = vmul.f32 %v330, %v441
        %v444 = vld [vmem:[%s277] sm:$0xff]
        %446 = vset.pattern.permute.xlu0 3
        %447 = vperm.xlu0 %446, %v331
        %v448 = vpop.permute.xlu0 %447
        %v450 = vmul.f32 %v444, %v448
        %v451 = vadd.f32 %v443, %v450
        %v452 = vld [vmem:[#allocation7] sm:$0xff]
        %v453 = vld [vmem:[#allocation7 + $0x8] sm:$0xff]
        %v454 = vld [vmem:[#allocation7 + $0x10] sm:$0xff]
        %v455 = vld [vmem:[#allocation7 + $0x18] sm:$0xff]
        %v456 = vld [vmem:[#allocation7 + $0x20] sm:$0xff]
        %v457 = vld [vmem:[#allocation7 + $0x28] sm:$0xff]
        %v458 = vld [vmem:[#allocation7 + $0x30] sm:$0xff]
        %v459 = vld [vmem:[#allocation7 + $0x38] sm:$0xff]
        %v460 = vld [vmem:[#allocation7 + $0x40] sm:$0xff]
        %v461 = vld [vmem:[#allocation7 + $0x48] sm:$0xff]
        %v462 = vld [vmem:[#allocation7 + $0x50] sm:$0xff]
        %v463 = vld [vmem:[#allocation7 + $0x58] sm:$0xff]
        %v464 = vld [vmem:[#allocation7 + $0x60] sm:$0xff]
        %v465 = vld [vmem:[#allocation7 + $0x68] sm:$0xff]
        %v466 = vld [vmem:[#allocation7 + $0x70] sm:$0xff]
        %v467 = vld [vmem:[#allocation7 + $0x78] sm:$0xff]
        %v468 = vld [vmem:[#allocation7 + $0x80] sm:$0xff]
        %v469 = vld [vmem:[#allocation7 + $0x88] sm:$0xff]
        %v470 = vld [vmem:[#allocation7 + $0x90] sm:$0xff]
        %v471 = vld [vmem:[#allocation7 + $0x98] sm:$0xff]
        %v472 = vld [vmem:[#allocation7 + $0xa0] sm:$0xff]
        %v473 = vld [vmem:[#allocation7 + $0xa8] sm:$0xff]
        %v474 = vld [vmem:[#allocation7 + $0xb0] sm:$0xff]
        %v475 = vld [vmem:[#allocation7 + $0xb8] sm:$0xff]
        %v476 = vld [vmem:[#allocation7 + $0xc0] sm:$0xff]
        %v477 = vld [vmem:[#allocation7 + $0xc8] sm:$0xff]
        %v478 = vld [vmem:[#allocation7 + $0xd0] sm:$0xff]
        %v479 = vld [vmem:[#allocation7 + $0xd8] sm:$0xff]
        %v480 = vld [vmem:[#allocation7 + $0xe0] sm:$0xff]
        %v481 = vld [vmem:[#allocation7 + $0xe8] sm:$0xff]
        %v482 = vld [vmem:[#allocation7 + $0xf0] sm:$0xff]
        %v483 = vld [vmem:[#allocation7 + $0xf8] sm:$0xff]
        %484 = vmatprep.subr.mxu0 %v453
        %485 = vmatpush1.msra.mxu0 %v452
        %486 = vmatprep.subr.mxu0 %v455
        %487 = vmatpush1.msra.mxu0 %v454
        %488 = vmatprep.subr.mxu0 %v457
        %489 = vmatpush1.msra.mxu0 %v456
        %490 = vmatprep.subr.mxu0 %v459
        %491 = vmatpush1.msra.mxu0 %v458
        %492 = vmatprep.subr.mxu0 %v461
        %493 = vmatpush1.msra.mxu0 %v460
        %494 = vmatprep.subr.mxu0 %v463
        %495 = vmatpush1.msra.mxu0 %v462
        %496 = vmatprep.subr.mxu0 %v465
        %497 = vmatpush1.msra.mxu0 %v464
        %498 = vmatprep.subr.mxu0 %v467
        %499 = vmatpush1.msra.mxu0 %v466
        %500 = vmatprep.subr.mxu0 %v469
        %501 = vmatpush1.msra.mxu0 %v468
        %502 = vmatprep.subr.mxu0 %v471
        %503 = vmatpush1.msra.mxu0 %v470
        %504 = vmatprep.subr.mxu0 %v473
        %505 = vmatpush1.msra.mxu0 %v472
        %506 = vmatprep.subr.mxu0 %v475
        %507 = vmatpush1.msra.mxu0 %v474
        %508 = vmatprep.subr.mxu0 %v477
        %509 = vmatpush1.msra.mxu0 %v476
        %510 = vmatprep.subr.mxu0 %v479
        %511 = vmatpush1.msra.mxu0 %v478
        %512 = vmatprep.subr.mxu0 %v481
        %513 = vmatpush1.msra.mxu0 %v480
        %514 = vmatprep.subr.mxu0 %v483
        %515 = vmatpush1.msra.mxu0 %v482
        %516 = vmatprep.subr.mxu0 0.0
        %517 = vmatpush1.msra.mxu0 0.0
        %518 = vmatprep.subr.mxu0 0.0
        %519 = vmatpush1.msra.mxu0 0.0
        %520 = vmatprep.subr.mxu0 0.0
        %521 = vmatpush1.msra.mxu0 0.0
        %522 = vmatprep.subr.mxu0 0.0
        %523 = vmatpush1.msra.mxu0 0.0
        %524 = vmatprep.subr.mxu0 0.0
        %525 = vmatpush1.msra.mxu0 0.0
        %526 = vmatprep.subr.mxu0 0.0
        %527 = vmatpush1.msra.mxu0 0.0
        %528 = vmatprep.subr.mxu0 0.0
        %529 = vmatpush1.msra.mxu0 0.0
        %530 = vmatprep.subr.mxu0 0.0
        %531 = vmatpush1.msra.mxu0 0.0
        %532 = vmatprep.subr.mxu0 0.0
        %533 = vmatpush1.msra.mxu0 0.0
        %534 = vmatprep.subr.mxu0 0.0
        %535 = vmatpush1.msra.mxu0 0.0
        %536 = vmatprep.subr.mxu0 0.0
        %537 = vmatpush1.msra.mxu0 0.0
        %538 = vmatprep.subr.mxu0 0.0
        %539 = vmatpush1.msra.mxu0 0.0
        %540 = vmatprep.subr.mxu0 0.0
        %541 = vmatpush1.msra.mxu0 0.0
        %542 = vmatprep.subr.mxu0 0.0
        %543 = vmatpush1.msra.mxu0 0.0
        %544 = vmatprep.subr.mxu0 0.0
        %545 = vmatpush1.msra.mxu0 0.0
        %546 = vmatprep.subr.mxu0 0.0
        %547 = vmatpush1.msra.mxu0 0.0
        %548 = vmatprep.mubr.f32.mxu0 0.0
        %549 = vmatmul.mubr.f32.gmra.mrb[0].mxu0 %v451
        %v550 = vpop.f32.mrb[0].mxu0
        %v551 = vadd.f32 0.0, %v550
        %v552 = vpop.f32.mrb[0].mxu0
        %v553 = vadd.f32 0.0, %v552
        %554 = vdwg.mxu0
        %v555 = vld [vmem:[%s5] sm:$0x1]
        %v557 = vlaneseq
        %v558 = vshrl.u32 %v557, 7
        %v559 = vsub.s32 0, %v558
        %v560 = vrot.slane %v555, %v559
        %v562 = vmul.f32 %v560, %v437
        %563 = vset.pattern.permute.xlu0 0
        %564 = vperm.xlu0 %563, %v331
        %v565 = vpop.permute.xlu0 %564
        %v567 = vmul.f32 %v562, %v565
        %v568 = vadd.f32 %v567, %v434
        %v569 = vmul.f32 %v568, 0.63661975
        %v570 = vadd.f32 %v569, 0.5
        %v571 = vfloor.f32 %v570
        %v572 = vmul.f32 %v571, 1.5703125
        %v573 = vsub.f32 %v568, %v572
        %v574 = vmul.f32 %v571, 0.0004837513
        %v575 = vsub.f32 %v573, %v574
        %v576 = vmul.f32 %v571, 7.54979e-08
        %v577 = vsub.f32 %v575, %v576
        %v578 = vcvt.f32.s32.to.zero.pseudo %v571
        %v579 = vand.u32 %v578, 3
        %v580 = vmul.f32 %v577, %v577
        %v581 = vmul.f32 %v577, %v580
        %v582 = vmul.f32 %v580, -0.00019515296
        %v583 = vadd.f32 %v582, 0.008332161
        %v584 = vmul.f32 %v580, %v583
        %v585 = vadd.f32 %v584, -0.16666655
        %v586 = vmul.f32 %v581, %v585
        %v587 = vadd.f32 %v577, %v586
        %v588 = vmul.f32 %v580, 0.5
        %v589 = vsub.f32 1.0, %v588
        %v590 = vmul.f32 %v580, %v580
        %v591 = vmul.f32 %v580, 2.4433157e-05
        %v592 = vadd.f32 %v591, -0.0013887316
        %v593 = vmul.f32 %v580, %v592
        %v594 = vadd.f32 %v593, 0.041666646
        %v595 = vmul.f32 %v590, %v594
        %v596 = vadd.f32 %v589, %v595
        %v597 = vand.u32 %v579, 1
        %vm598 = vcmp.eq.s32.totalorder %v597, 1
        %v599 = vsel %vm598, %v596, %v587
        %v600 = vsel %vm598, %v587, %v596
        %v601 = vand.u32 %v579, 2
        %vm602 = vcmp.eq.s32.totalorder %v601, 2
        %v603 = vsub.f32 0.0, %v599
        %v604 = vsel %vm602, %v603, %v599
        %v605 = vadd.s32 %v579, 1
        %v606 = vand.u32 %v605, 2
        %vm607 = vcmp.eq.s32.totalorder %v606, 2
        %v608 = vsub.f32 0.0, %v600
        %v609 = vsel %vm607, %v608, %v600
        %610 = vset.pattern.permute.xlu0 1
        %611 = vperm.xlu0 %610, %v331
        %v612 = vpop.permute.xlu0 %611
        %v614 = vmul.f32 %v562, %v612
        %v615 = vadd.f32 %v614, %v434
        %v616 = vmul.f32 %v615, 0.63661975
        %v617 = vadd.f32 %v616, 0.5
        %v618 = vfloor.f32 %v617
        %v619 = vmul.f32 %v618, 1.5703125
        %v620 = vsub.f32 %v615, %v619
        %v621 = vmul.f32 %v618, 0.0004837513
        %v622 = vsub.f32 %v620, %v621
        %v623 = vmul.f32 %v618, 7.54979e-08
        %v624 = vsub.f32 %v622, %v623
        %v625 = vcvt.f32.s32.to.zero.pseudo %v618
        %v626 = vand.u32 %v625, 3
        %v627 = vmul.f32 %v624, %v624
        %v628 = vmul.f32 %v624, %v627
        %v629 = vmul.f32 %v627, -0.00019515296
        %v630 = vadd.f32 %v629, 0.008332161
        %v631 = vmul.f32 %v627, %v630
        %v632 = vadd.f32 %v631, -0.16666655
        %v633 = vmul.f32 %v628, %v632
        %v634 = vadd.f32 %v624, %v633
        %v635 = vmul.f32 %v627, 0.5
        %v636 = vsub.f32 1.0, %v635
        %v637 = vmul.f32 %v627, %v627
        %v638 = vmul.f32 %v627, 2.4433157e-05
        %v639 = vadd.f32 %v638, -0.0013887316
        %v640 = vmul.f32 %v627, %v639
        %v641 = vadd.f32 %v640, 0.041666646
        %v642 = vmul.f32 %v637, %v641
        %v643 = vadd.f32 %v636, %v642
        %v644 = vand.u32 %v626, 1
        %vm645 = vcmp.eq.s32.totalorder %v644, 1
        %v646 = vsel %vm645, %v643, %v634
        %v647 = vsel %vm645, %v634, %v643
        %v648 = vand.u32 %v626, 2
        %vm649 = vcmp.eq.s32.totalorder %v648, 2
        %v650 = vsub.f32 0.0, %v646
        %v651 = vsel %vm649, %v650, %v646
        %v652 = vadd.s32 %v626, 1
        %v653 = vand.u32 %v652, 2
        %vm654 = vcmp.eq.s32.totalorder %v653, 2
        %v655 = vsub.f32 0.0, %v647
        %v656 = vsel %vm654, %v655, %v647
        %657 = vset.pattern.permute.xlu0 2
        %658 = vperm.xlu0 %657, %v331
        %v659 = vpop.permute.xlu0 %658
        %v661 = vmul.f32 %v562, %v659
        %v662 = vadd.f32 %v661, %v434
        %v663 = vmul.f32 %v662, 0.63661975
        %v664 = vadd.f32 %v663, 0.5
        %v665 = vfloor.f32 %v664
        %v666 = vmul.f32 %v665, 1.5703125
        %v667 = vsub.f32 %v662, %v666
        %v668 = vmul.f32 %v665, 0.0004837513
        %v669 = vsub.f32 %v667, %v668
        %v670 = vmul.f32 %v665, 7.54979e-08
        %v671 = vsub.f32 %v669, %v670
        %v672 = vcvt.f32.s32.to.zero.pseudo %v665
        %v673 = vand.u32 %v672, 3
        %v674 = vmul.f32 %v671, %v671
        %v675 = vmul.f32 %v671, %v674
        %v676 = vmul.f32 %v674, -0.00019515296
        %v677 = vadd.f32 %v676, 0.008332161
        %v678 = vmul.f32 %v674, %v677
        %v679 = vadd.f32 %v678, -0.16666655
        %v680 = vmul.f32 %v675, %v679
        %v681 = vadd.f32 %v671, %v680
        %v682 = vmul.f32 %v674, 0.5
        %v683 = vsub.f32 1.0, %v682
        %v684 = vmul.f32 %v674, %v674
        %v685 = vmul.f32 %v674, 2.4433157e-05
        %v686 = vadd.f32 %v685, -0.0013887316
        %v687 = vmul.f32 %v674, %v686
        %v688 = vadd.f32 %v687, 0.041666646
        %v689 = vmul.f32 %v684, %v688
        %v690 = vadd.f32 %v683, %v689
        %v691 = vand.u32 %v673, 1
        %vm692 = vcmp.eq.s32.totalorder %v691, 1
        %v693 = vsel %vm692, %v690, %v681
        %v694 = vsel %vm692, %v681, %v690
        %v695 = vand.u32 %v673, 2
        %vm696 = vcmp.eq.s32.totalorder %v695, 2
        %v697 = vsub.f32 0.0, %v693
        %v698 = vsel %vm696, %v697, %v693
        %v699 = vadd.s32 %v673, 1
        %v700 = vand.u32 %v699, 2
        %vm701 = vcmp.eq.s32.totalorder %v700, 2
        %v702 = vsub.f32 0.0, %v694
        %v703 = vsel %vm701, %v702, %v694
        %v704 = vmul.f32 %v651, %v441
        %v705 = vmul.f32 %v698, %v448
        %v706 = vadd.f32 %v704, %v705
        %v707 = vsub.f32 %v604, %v706
        %v708 = vadd.f32 %v707, %v551
        %709 = vst [vmem:[%s321] sm:$0xff] %v708
        %v710 = vmul.f32 %v656, %v441
        %v711 = vmul.f32 %v703, %v448
        %v712 = vadd.f32 %v710, %v711
        %v713 = vsub.f32 %v609, %v712
        %v714 = vadd.f32 %v713, %v553
        %715 = vst [vmem:[%s321 + $0x8] sm:$0xff] %v714
        %s716 = sand.u32 %s173, 1
        %s717 = scalar_lea.sflag [#allocation4], %s716
        %s718 = sand.u32 %s173, 1
        %s719 = smul.addr %s718, 16
        %s720 = scalar_lea.vmem [#allocation8], %s719
        // Predicated region
        $region57: #{tpu_custom_call.1} parent=43 // pred_check
          %p721 = pneg %p183
        $region58: #{tpu_custom_call.1} parent=43 // pred_check_branch
          %723 = sbr.rel (%p721) target = $region60
        $region59: #{tpu_custom_call.1} parent=43 // pred_region
          %s725 = ssub.s32 256, 256
          %726 = vsyncadd %s717, %s725
          %s727 = smul.addr %s24, 2
          %s728 = smul.addr %s727, 128
          %s729 = scalar_lea.hbm %s6, %s728
          %s731 = sshll.u32 %s720, 4
          %s732 = int_to_ptr.vmem [resolvable:$true] %s731
          %734 = dma.vmem_to_hbm [thread:$0]  %s732, 256, %s729, %s717
        $region60: #{tpu_custom_call.1} parent=43 // pred_fallthru
          _
      $region44: #{tpu_custom_call.1} parent=5 // pred_fallthru
        _
      %p735 = scmp.le.s32.totalorder 2, %s19
      // Predicated region
      $region61: #{tpu_custom_call.1} parent=5 // pred_check
        %p736 = pneg %p735
      $region62: #{tpu_custom_call.1} parent=5 // pred_check_branch
        %738 = sbr.rel (%p736) target = $region64
      $region63: #{tpu_custom_call.1} parent=5 // pred_region
        %s739 = ssub.s32 %s19, 2
        // Predicated region
        $region65: #{tpu_custom_call.1} parent=63 // pred_check
          %p740 = pneg %p189
        $region66: #{tpu_custom_call.1} parent=63 // pred_check_branch
          %742 = sbr.rel (%p740) target = $region68
        $region67: #{tpu_custom_call.1} parent=63 // pred_region
          %s743 = sand.u32 %s174, 1
          %s744 = scalar_lea.sflag [#allocation4], %s743
          %s745 = sand.u32 %s174, 1
          %s746 = smul.addr %s745, 16
          %s747 = scalar_lea.vmem [#allocation8], %s746
          %748 = dma.done %s744, 256
        $region68: #{tpu_custom_call.1} parent=63 // pred_fallthru
          _
      $region64: #{tpu_custom_call.1} parent=5 // pred_fallthru
        _
    $region6: #{tpu_custom_call.1} parent=1 // loop_footer
      %s23 = sadd.s32 1, %s19
    $region7: #{tpu_custom_call.1} parent=1 // loop_footer_branch
      %18 = sbr.rel target = $region3
    $region8: #{tpu_custom_call.1} parent=1 // loop_exit
      _
    %749 = vsyncpa [#allocation3], 1
    %s750 = scalar_lea.sflag [#allocation3], 1
    %751 = vsyncpa %s750, 1
    %752 = vsyncpa [#allocation6], 1
    %753 = vsyncpa [#allocation4], 1
    %s754 = scalar_lea.sflag [#allocation4], 1
    %755 = vsyncpa %s754, 1

</llo_original>
